<compile_context>
chip_gen: v7x
topology: tpu7x:2x2x1
jax: 0.10.0
libtpu: 0.0.40
codegen_flags: <defaults>
</compile_context>

<pallas_src>
import functools

import jax
import jax.numpy as jnp
from jax.experimental import pallas as pl
from jax.experimental.pallas import tpu as pltpu


def _gauss_kernel(x_ref, w_ref, b_ref, o_ref, *, scale, exp_in_bf16, precision):
    # x_ref: (tm, K); w_ref: (K, tn) pre-transposed; b_ref: (1, tn) f32.
    y = jax.lax.dot_general(
        x_ref[...], w_ref[...],
        dimension_numbers=(((1,), (0,)), ((), ())),
        preferred_element_type=jnp.float32,
        precision=precision,
    )                                        # (tm, tn) f32 on the MXU
    z = scale * (y + b_ref[...])             # VPU, f32, (1, tn) broadcast
    neg_z2 = -(z * z)
    if exp_in_bf16:
        # v6e/v7x bf16 EUP: ~2x transcendental throughput; rounding is below
        # the bf16 output quantization anyway.
        act = jnp.exp(neg_z2.astype(jnp.bfloat16))
    else:
        act = jnp.exp(neg_z2)                # EUP slot, f32
    o_ref[...] = act.astype(o_ref.dtype)


def _round_up(n, m):
    return ((n + m - 1) // m) * m


def _largest_divisor_tile(dim, cap, multiple):
    """Largest t <= cap with t % multiple == 0 and dim % t == 0 (dim is a
    multiple of `multiple`, so this always succeeds)."""
    cap = max(multiple, min(cap, dim))
    t = (cap // multiple) * multiple
    while t >= multiple:
        if dim % t == 0:
            return t
        t -= multiple
    return dim


def _default_exp_in_bf16(out_dtype):
    if jnp.dtype(out_dtype) != jnp.dtype(jnp.bfloat16):
        return False
    try:
        kind = jax.devices()[0].device_kind.lower()
    except Exception:
        return True
    return "v5" not in kind   # v5e EUP has no bf16 path


def _vmem_budget_bytes():
    try:
        cap = pltpu.get_tpu_info().vmem_capacity_bytes
    except Exception:
        cap = 64 << 20        # assume the smallest (v7x per-TC) VMEM
    return int(0.75 * cap)    # leave Mosaic headroom for internal scratch


def gauss_layer(x, weight, bias, *, scale=10.0, out_dtype=None,
                tm=256, tn=512, precision=None):
    """GaussLayer forward: exp(-(scale * (x @ W^T + b))**2).

    x: (..., K); weight: (N, K) torch nn.Linear layout; bias: (N,).
    out_dtype defaults to x.dtype (bf16 in -> bf16 out halves HBM writes).
    K (in_features) is kept whole per block, fine for SIREN-style widths.
    # TODO(synk): add a K-reduction grid axis (f32 VMEM accumulator) for K >> 4096.
    """
    orig_shape = x.shape
    K = orig_shape[-1]
    x2 = x.reshape(-1, K)
    M = x2.shape[0]
    N, K2 = weight.shape
    assert K2 == K, "weight must be (out_features, in_features)"
    assert bias.shape == (N,)

    if out_dtype is None:
        out_dtype = x.dtype
    out_dtype = jnp.dtype(out_dtype)
    exp_in_bf16 = _default_exp_in_bf16(out_dtype)

    # dtype-aware sublane multiple (8 f32 / 16 bf16 / 32 int8).
    sublane = max(8, 32 // x2.dtype.itemsize)

    # Pad to lane/sublane multiples so all stores are full-width vst and VMEM
    # blocks stay bounded; slice the result back at the end.
    M_pad = _round_up(M, sublane)
    N_pad = _round_up(N, 128)
    x_p = x2 if M_pad == M else jnp.pad(x2, ((0, M_pad - M), (0, 0)))
    # Canonical (K, N) weight for the MXU (no per-step XLU re-orientation).
    # Real networks should cache this transposed copy once.
    w_t = jnp.asarray(weight).T
    w_p = w_t if N_pad == N else jnp.pad(w_t, ((0, 0), (0, N_pad - N)))
    b_p = bias.astype(jnp.float32)
    if N_pad != N:
        b_p = jnp.pad(b_p, (0, N_pad - N))
    b_p = b_p.reshape(1, N_pad)

    # Tile selection: lane-dense tn, sublane-multiple tm, shrink to VMEM budget.
    tm = _largest_divisor_tile(M_pad, tm, sublane)
    tn = _largest_divisor_tile(N_pad, tn, 128)

    o_size = out_dtype.itemsize

    def footprint(tm_, tn_):
        return (2 * tm_ * K * x_p.dtype.itemsize      # x blocks (double-buffered)
                + 2 * K * tn_ * w_p.dtype.itemsize    # weight blocks
                + 2 * 8 * tn_ * 4                     # bias blocks (sublane-padded)
                + 2 * tm_ * tn_ * o_size              # output blocks
                + 2 * tm_ * tn_ * 4)                  # f32 intermediates slack

    budget = _vmem_budget_bytes()
    while footprint(tm, tn) > budget and tn > 128:
        tn = _largest_divisor_tile(N_pad, tn // 2, 128)
    while footprint(tm, tn) > budget and tm > sublane:
        tm = _largest_divisor_tile(M_pad, tm // 2, sublane)

    grid_n = N_pad // tn
    grid_m = M_pad // tm
    # N blocks outer, M blocks inner: weight/bias tiles stay resident across
    # the inner M sweep; only the smaller x tile restreams.
    grid = (grid_n, grid_m)

    cp_kwargs = dict(dimension_semantics=("parallel", "parallel"))
    est = footprint(tm, tn)
    if est > (12 << 20):   # approaching the 16/32 MiB scoped defaults
        cp_kwargs["vmem_limit_bytes"] = min(budget, max(32 << 20, int(1.5 * est)))

    cost = pl.CostEstimate(
        flops=2 * M_pad * N_pad * K,
        transcendentals=M_pad * N_pad,
        bytes_accessed=(M_pad * K * x_p.dtype.itemsize
                        + K * N_pad * w_p.dtype.itemsize
                        + N_pad * 4
                        + M_pad * N_pad * o_size),
    )

    kernel = functools.partial(_gauss_kernel, scale=float(scale),
                               exp_in_bf16=exp_in_bf16, precision=precision)

    out_p = pl.pallas_call(
        kernel,
        out_shape=jax.ShapeDtypeStruct((M_pad, N_pad), out_dtype),
        grid_spec=pltpu.PrefetchScalarGridSpec(
            num_scalar_prefetch=0,
            grid=grid,
            in_specs=[
                pl.BlockSpec((tm, K), lambda j, i: (i, 0)),   # x row tile
                pl.BlockSpec((K, tn), lambda j, i: (0, j)),   # weight (K, tn)
                pl.BlockSpec((1, tn), lambda j, i: (0, j)),   # bias (1, tn)
            ],
            out_specs=pl.BlockSpec((tm, tn), lambda j, i: (i, j)),
        ),
        compiler_params=pltpu.CompilerParams(**cp_kwargs),
        cost_estimate=cost,
    )(x_p, w_p, b_p)

    out = out_p[:M, :N]
    return out.reshape(*orig_shape[:-1], N)


def gauss_layer_ref(x, weight, bias, *, scale=10.0):
    y = jnp.dot(x, weight.T, precision=jax.lax.Precision.HIGHEST) + bias
    return jnp.exp(-(scale * y) ** 2)


if __name__ == "__main__":
    # Small SIREN-like layer: M points, in=64, out=256.
    M, in_features, out_features = 512, 64, 256
    scale = 10.0

    key = jax.random.PRNGKey(0)
    kx, kw, kb = jax.random.split(key, 3)

    bound = 1.0 / jnp.sqrt(jnp.float32(in_features))
    x = jax.random.normal(kx, (M, in_features), dtype=jnp.float32) * 0.05
    weight = jax.random.uniform(kw, (out_features, in_features),
                                minval=-bound, maxval=bound, dtype=jnp.float32)
    bias = jax.random.uniform(kb, (out_features,),
                              minval=-bound, maxval=bound, dtype=jnp.float32)

    # f32 path (default MXU precision; strict torch-f32 parity would pass
    # precision=jax.lax.Precision.HIGHEST).
    out = jax.block_until_ready(gauss_layer(x, weight, bias, scale=scale))
    ref = gauss_layer_ref(x, weight, bias, scale=scale)
    assert out.shape == (M, out_features) and out.dtype == jnp.float32
    assert jnp.allclose(out, ref, atol=5e-3, rtol=5e-3), "f32 mismatch vs ref"

    # bf16 fast path: bf16 in -> bf16 out (halved HBM write stream), bf16 exp
    # on v6e/v7x; compare against an f32 reference on the same rounded inputs.
    xb = x.astype(jnp.bfloat16)
    wb = weight.astype(jnp.bfloat16)
    out_bf = jax.block_until_ready(gauss_layer(xb, wb, bias, scale=scale))
    ref_bf = gauss_layer_ref(xb.astype(jnp.float32), wb.astype(jnp.float32),
                             bias, scale=scale)
    assert out_bf.dtype == jnp.bfloat16
    assert jnp.allclose(out_bf.astype(jnp.float32), ref_bf,
                        atol=2e-2, rtol=2e-2), "bf16 mismatch vs ref"

    # Unaligned M / N exercise the zero-padding path (no masked partial stores).
    out_odd = jax.block_until_ready(
        gauss_layer(x[:100], weight[:200], bias[:200], scale=scale))
    ref_odd = gauss_layer_ref(x[:100], weight[:200], bias[:200], scale=scale)
    assert out_odd.shape == (100, 200)
    assert jnp.allclose(out_odd, ref_odd, atol=5e-3, rtol=5e-3), "pad mismatch"

    print("KERNEL_OK")
</pallas_src>

<mosaic_0001>
module attributes {stable_mosaic.version = 11 : i64} {
  func.func @_gauss_kernel(%arg0: i32, %arg1: i32, %arg2: memref<256x64xf32, #tpu.memory_space<vmem>>, %arg3: memref<64x256xf32, #tpu.memory_space<vmem>>, %arg4: memref<1x256xf32, #tpu.memory_space<vmem>>, %arg5: memref<256x256xf32, #tpu.memory_space<vmem>>) attributes {dimension_semantics = [#tpu.dimension_semantics<parallel>, #tpu.dimension_semantics<parallel>], iteration_bounds = array<i64: 1, 2>, scalar_prefetch = 0 : i64, scratch_operands = 0 : i64, tpu.core_type = #tpu.core_type<tc>, window_params = [{transform_indices = @transform_0, window_bounds = array<i64: 256, 64>}, {transform_indices = @transform_1, window_bounds = array<i64: 64, 256>}, {transform_indices = @transform_2, window_bounds = array<i64: 1, 256>}, {transform_indices = @transform_3, window_bounds = array<i64: 256, 256>}]} {
    %c0 = arith.constant 0 : index
    %c0_0 = arith.constant 0 : index
    %0 = vector.load %arg2[%c0, %c0_0] : memref<256x64xf32, #tpu.memory_space<vmem>>, vector<256x64xf32>
    %c0_1 = arith.constant 0 : index
    %c0_2 = arith.constant 0 : index
    %1 = vector.load %arg3[%c0_1, %c0_2] : memref<64x256xf32, #tpu.memory_space<vmem>>, vector<64x256xf32>
    %cst = arith.constant dense<0.000000e+00> : vector<256x256xf32>
    %2 = tpu.matmul %0, %1, %cst {dimension_numbers = #tpu.dot_dimension_numbers<[1], [0], [0], [1], [0, 0, 1, 1], [], []>} : vector<256x64xf32>, vector<64x256xf32>, vector<256x256xf32> -> vector<256x256xf32>
    %c0_3 = arith.constant 0 : index
    %c0_4 = arith.constant 0 : index
    %3 = vector.load %arg4[%c0_3, %c0_4] : memref<1x256xf32, #tpu.memory_space<vmem>>, vector<1x256xf32>
    %4 = vector.broadcast %3 : vector<1x256xf32> to vector<256x256xf32>
    %5 = arith.addf %2, %4 : vector<256x256xf32>
    %cst_5 = arith.constant 1.000000e+01 : f32
    %6 = vector.broadcast %cst_5 : f32 to vector<256x256xf32>
    %7 = arith.mulf %6, %5 : vector<256x256xf32>
    %8 = arith.mulf %7, %7 : vector<256x256xf32>
    %cst_6 = arith.constant 0.000000e+00 : f32
    %9 = vector.broadcast %cst_6 : f32 to vector<256x256xf32>
    %10 = arith.subf %9, %8 : vector<256x256xf32>
    %11 = math.exp %10 : vector<256x256xf32>
    %c0_7 = arith.constant 0 : index
    %c0_8 = arith.constant 0 : index
    %12 = vector.load %arg5[%c0_7, %c0_8] : memref<256x256xf32, #tpu.memory_space<vmem>>, vector<256x256xf32>
    tpu.vector_store %arg5[%c0_7, %c0_8], %11 {strides = array<i32>} : memref<256x256xf32, #tpu.memory_space<vmem>>, vector<256x256xf32>,
    return
  }
  func.func @transform_0(%arg0: i32, %arg1: i32) -> (i32, i32) {
    %c0_i32 = arith.constant 0 : i32
    %c0_i32_0 = arith.constant 0 : i32
    return %arg1, %c0_i32 : i32, i32
  }
  func.func @transform_1(%arg0: i32, %arg1: i32) -> (i32, i32) {
    %c0_i32 = arith.constant 0 : i32
    %c0_i32_0 = arith.constant 0 : i32
    return %c0_i32, %arg0 : i32, i32
  }
  func.func @transform_2(%arg0: i32, %arg1: i32) -> (i32, i32) {
    %c0_i32 = arith.constant 0 : i32
    %c0_i32_0 = arith.constant 0 : i32
    return %c0_i32, %arg0 : i32, i32
  }
  func.func @transform_3(%arg0: i32, %arg1: i32) -> (i32, i32) {
    %c0_i32 = arith.constant 0 : i32
    return %arg1, %arg0 : i32, i32
  }
}

</mosaic_0001>

<llo_original>
// kernel: tpu_custom_call.1
$region0: #{tpu_custom_call.1}
  #allocation0 [shape = 'u32[]', space=smem, size = 0x4, offset = 0x4, fixed_abs, tag = 'smem constant byte address 0x4 - core index']
  #allocation1 [shape = 'u32[144,128]{1,0:T(1,128)}', space=vmem, size = 0x12000, scoped, tag = 'internal scratch']
  %s0 = inlined_call_operand.vmem [shape: f32[512,64], index: 0, kind: input, shape index: {}]
  %s1 = inlined_call_operand.vmem [shape: f32[64,256], index: 1, kind: input, shape index: {}]
  %s2 = inlined_call_operand.vmem [shape: f32[1,256], index: 2, kind: input, shape index: {}]
  %s3 = inlined_call_operand.hbm [shape: f32[512,256], index: 3, kind: output, shape index: {}]
  %s4 = sld [smem:[#allocation0]]
  $region45: #{tpu_custom_call.1} parent=0
    _
  %s6 = ssub.s32 1, %s4
  %s7 = scalar_select 0, %s6, %s4
  $region1: #{tpu_custom_call.1} parent=0
    #allocation2 [shape = 'u8[524288]{0}', space=vmem, size = 0x80000, scoped, tag = 'output window, operand 0']
    #allocation3 [shape = 's32[2]{0}', space=sflag, size = 0x8, scoped, tag = 'scoped memory for tpu_custom_call.1']
    %8 = vsyncpa [#allocation3], 0
    %s9 = scalar_lea.sflag [#allocation3], 1
    %10 = vsyncpa %s9, 0
    loop: start=0, step=1, limit=4
    $region2: #{tpu_custom_call.1} parent=1 // loop_pre_header
      _
    $region3: #{tpu_custom_call.1} parent=1 // loop_header
      %s12 = sphi 0, %s16
      %p13 = scmp.ge.s32.totalorder %s12, 4
      %s19 = sphi 0, %s31
      %s20 = sphi 0, %s27
      %s21 = sphi 0, %s19
      %s22 = sphi 0, %s20
      %s23 = sphi 0, %s21
      %s24 = sphi 0, %s22
      %s34 = sphi 0, %s36
      %s37 = sphi 0, %s34
      %s38 = sphi 0, %s37
      %s54 = sphi 0, %s38
      %s60 = sphi 0, %s62
      %s63 = sphi 0, %s60
      %s64 = sphi 0, %s63
      %s80 = sphi 0, %s64
      %s86 = sphi 0, %s88
      %s89 = sphi 0, %s86
      %s90 = sphi 0, %s89
      %s106 = sphi 0, %s90
      %s114 = sphi 0, %s116
      %s117 = sphi 0, %s114
      %s118 = sphi 0, %s117
      %s134 = sphi 0, %s118
    $region4: #{tpu_custom_call.1} parent=1 // loop_header_branch
      %15 = sbr.rel (%p13) target = $region8
    $region5: #{tpu_custom_call.1} parent=1 // loop_body
      %s17 = ssub.s32 %s12, 1
      %s18 = ssub.s32 %s12, 2
      %s25 = sadd.s32 1, %s20
      %p26 = scmp.ge.s32.totalorder %s25, 2
      %s27 = scalar_select %p26, 0, %s25
      %s28 = sadd.s32 1, %s19
      %s29 = scalar_select %p26, %s28, %s19
      %p30 = scmp.ge.s32.totalorder %s29, 1
      %s31 = scalar_select %p30, 0, %s29
      %s32 = ssub.s32 %s20, %s27
      %p33 = scmp.eq.s32.totalorder %s32, 0
      %s35 = sadd.s32 %s34, 1
      %s36 = scalar_select %p33, %s34, %s35
      %p39 = pneg %p33
      %p40 = scmp.eq.s32.totalorder %s12, 1
      %p41 = por %p39, %p40
      %p42 = scmp.ne.s32.totalorder %s34, %s37
      %p43 = scmp.eq.s32.totalorder %s12, 0
      %p44 = por %p42, %p43
      %p45 = scmp.ne.s32.totalorder %s34, %s37
      %p46 = scmp.eq.s32.totalorder %s17, 1
      %p47 = por %p45, %p46
      %p48 = scmp.ne.s32.totalorder %s37, %s38
      %p49 = scmp.eq.s32.totalorder %s17, 0
      %p50 = por %p48, %p49
      %p51 = scmp.ne.s32.totalorder %s37, %s38
      %p52 = scmp.eq.s32.totalorder %s18, 1
      %p53 = por %p51, %p52
      %p55 = scmp.ne.s32.totalorder %s38, %s54
      %p56 = scmp.eq.s32.totalorder %s18, 0
      %p57 = por %p55, %p56
      %s58 = ssub.s32 %s19, %s31
      %p59 = scmp.eq.s32.totalorder %s58, 0
      %s61 = sadd.s32 %s60, 1
      %s62 = scalar_select %p59, %s60, %s61
      %p65 = pneg %p59
      %p66 = scmp.eq.s32.totalorder %s12, 1
      %p67 = por %p65, %p66
      %p68 = scmp.ne.s32.totalorder %s60, %s63
      %p69 = scmp.eq.s32.totalorder %s12, 0
      %p70 = por %p68, %p69
      %p71 = scmp.ne.s32.totalorder %s60, %s63
      %p72 = scmp.eq.s32.totalorder %s17, 1
      %p73 = por %p71, %p72
      %p74 = scmp.ne.s32.totalorder %s63, %s64
      %p75 = scmp.eq.s32.totalorder %s17, 0
      %p76 = por %p74, %p75
      %p77 = scmp.ne.s32.totalorder %s63, %s64
      %p78 = scmp.eq.s32.totalorder %s18, 1
      %p79 = por %p77, %p78
      %p81 = scmp.ne.s32.totalorder %s64, %s80
      %p82 = scmp.eq.s32.totalorder %s18, 0
      %p83 = por %p81, %p82
      %s84 = ssub.s32 %s19, %s31
      %p85 = scmp.eq.s32.totalorder %s84, 0
      %s87 = sadd.s32 %s86, 1
      %s88 = scalar_select %p85, %s86, %s87
      %p91 = pneg %p85
      %p92 = scmp.eq.s32.totalorder %s12, 1
      %p93 = por %p91, %p92
      %p94 = scmp.ne.s32.totalorder %s86, %s89
      %p95 = scmp.eq.s32.totalorder %s12, 0
      %p96 = por %p94, %p95
      %p97 = scmp.ne.s32.totalorder %s86, %s89
      %p98 = scmp.eq.s32.totalorder %s17, 1
      %p99 = por %p97, %p98
      %p100 = scmp.ne.s32.totalorder %s89, %s90
      %p101 = scmp.eq.s32.totalorder %s17, 0
      %p102 = por %p100, %p101
      %p103 = scmp.ne.s32.totalorder %s89, %s90
      %p104 = scmp.eq.s32.totalorder %s18, 1
      %p105 = por %p103, %p104
      %p107 = scmp.ne.s32.totalorder %s90, %s106
      %p108 = scmp.eq.s32.totalorder %s18, 0
      %p109 = por %p107, %p108
      %s110 = ssub.s32 %s20, %s27
      %s111 = ssub.s32 %s19, %s31
      %s112 = sor.u32 %s110, %s111
      %p113 = scmp.eq.s32.totalorder %s112, 0
      %s115 = sadd.s32 %s114, 1
      %s116 = scalar_select %p113, %s114, %s115
      %p119 = pneg %p113
      %p120 = scmp.eq.s32.totalorder %s12, 1
      %p121 = por %p119, %p120
      %p122 = scmp.ne.s32.totalorder %s114, %s117
      %p123 = scmp.eq.s32.totalorder %s12, 0
      %p124 = por %p122, %p123
      %p125 = scmp.ne.s32.totalorder %s114, %s117
      %p126 = scmp.eq.s32.totalorder %s17, 1
      %p127 = por %p125, %p126
      %p128 = scmp.ne.s32.totalorder %s117, %s118
      %p129 = scmp.eq.s32.totalorder %s17, 0
      %p130 = por %p128, %p129
      %p131 = scmp.ne.s32.totalorder %s117, %s118
      %p132 = scmp.eq.s32.totalorder %s18, 1
      %p133 = por %p131, %p132
      %p135 = scmp.ne.s32.totalorder %s118, %s134
      %p136 = scmp.eq.s32.totalorder %s18, 0
      %p137 = por %p135, %p136
      %p138 = scmp.le.s32.totalorder 1, %s12
      %p139 = scmp.lt.s32.totalorder %s12, 3
      %p140 = pnand %p138, %p139
      %p141 = pneg %p140
      // Predicated region
      $region9: #{tpu_custom_call.1} parent=5 // pred_check
        _
      $region10: #{tpu_custom_call.1} parent=5 // pred_check_branch
        %143 = sbr.rel (%p140) target = $region12
      $region11: #{tpu_custom_call.1} parent=5 // pred_region
        %s144 = ssub.s32 %s12, 1
        // Predicated region
        $region13: #{tpu_custom_call.1} parent=11 // pred_check
          %p145 = pneg %p76
        $region14: #{tpu_custom_call.1} parent=11 // pred_check_branch
          %147 = sbr.rel (%p145) target = $region16
        $region15: #{tpu_custom_call.1} parent=11 // pred_region
          %s148 = smul.u32 2, %s21
          %p149 = scmp.lt.s32.totalorder %s148, 1
          %s150 = scalar_select %p149, %s148, 1
          %s151 = smul.addr %s150, 8
          %s152 = scalar_lea.vmem %s1, %s151
          %s153 = smul.u32 2, %s21
        $region16: #{tpu_custom_call.1} parent=11 // pred_fallthru
          _
        // Predicated region
        $region17: #{tpu_custom_call.1} parent=11 // pred_check
          %p154 = pneg %p102
        $region18: #{tpu_custom_call.1} parent=11 // pred_check_branch
          %156 = sbr.rel (%p154) target = $region20
        $region19: #{tpu_custom_call.1} parent=11 // pred_region
          %s157 = smul.u32 2, %s21
          %p158 = scmp.lt.s32.totalorder %s157, 1
          %s159 = scalar_select %p158, %s157, 1
          %s160 = scalar_lea.vmem %s2, %s159
          %s161 = smul.u32 2, %s21
        $region20: #{tpu_custom_call.1} parent=11 // pred_fallthru
          _
      $region12: #{tpu_custom_call.1} parent=5 // pred_fallthru
        _
      %p162 = scmp.lt.s32.totalorder %s12, 2
      // Predicated region
      $region21: #{tpu_custom_call.1} parent=5 // pred_check
        %p163 = pneg %p162
      $region22: #{tpu_custom_call.1} parent=5 // pred_check_branch
        %165 = sbr.rel (%p163) target = $region24
      $region23: #{tpu_custom_call.1} parent=5 // pred_region
        // Predicated region
        $region25: #{tpu_custom_call.1} parent=23 // pred_check
          %p166 = pneg %p44
        $region26: #{tpu_custom_call.1} parent=23 // pred_check_branch
          %168 = sbr.rel (%p166) target = $region28
        $region27: #{tpu_custom_call.1} parent=23 // pred_region
          %s169 = smul.u32 32, %s20
          %p170 = scmp.lt.s32.totalorder %s169, 63
          %s171 = scalar_select %p170, %s169, 63
          %s172 = smul.addr %s171, 8
          %s173 = scalar_lea.vmem %s0, %s172
          %s174 = smul.u32 32, %s20
        $region28: #{tpu_custom_call.1} parent=23 // pred_fallthru
          _
      $region24: #{tpu_custom_call.1} parent=5 // pred_fallthru
        _
      %p175 = scmp.le.s32.totalorder 1, %s12
      %p176 = scmp.lt.s32.totalorder %s12, 3
      %p177 = pnand %p175, %p176
      %p178 = pneg %p177
      // Predicated region
      $region29: #{tpu_custom_call.1} parent=5 // pred_check
        _
      $region30: #{tpu_custom_call.1} parent=5 // pred_check_branch
        %180 = sbr.rel (%p177) target = $region32
      $region31: #{tpu_custom_call.1} parent=5 // pred_region
        %s181 = ssub.s32 %s12, 1
        %s182 = smul.u32 32, %s22
        %p183 = scmp.lt.s32.totalorder %s182, 63
        %s184 = scalar_select %p183, %s182, 63
        %s185 = smul.addr %s184, 8
        %s186 = scalar_lea.vmem %s0, %s185
        %p187 = pneg %p50
        %p188 = pneg %p47
        %s189 = smul.u32 2, %s21
        %p190 = scmp.lt.s32.totalorder %s189, 1
        %s191 = scalar_select %p190, %s189, 1
        %s192 = smul.addr %s191, 8
        %s193 = scalar_lea.vmem %s1, %s192
        %p194 = pneg %p76
        %p195 = pneg %p73
        %s196 = smul.u32 2, %s21
        %p197 = scmp.lt.s32.totalorder %s196, 1
        %s198 = scalar_select %p197, %s196, 1
        %s199 = scalar_lea.vmem %s2, %s198
        %p200 = pneg %p102
        %p201 = pneg %p99
        %p202 = pneg %p130
        %p203 = pneg %p127
        %s204 = sand.u32 %s117, 1
        %s205 = scalar_lea.sflag [#allocation3], %s204
        %s206 = sand.u32 %s117, 1
        %s207 = smul.addr %s206, 512
        %s208 = scalar_lea.vmem [#allocation2], %s207
        %s209 = smul.u32 32, %s22
        %p210 = scmp.lt.s32.totalorder %s209, 63
        %s211 = scalar_select %p210, %s209, 63
        %s212 = smul.addr %s211, 8
        %s213 = scalar_lea.vmem %s0, %s212
        %s214 = smul.u32 32, %s22
        %s215 = smul.u32 2, %s21
        %p216 = scmp.lt.s32.totalorder %s215, 1
        %s217 = scalar_select %p216, %s215, 1
        %s218 = smul.addr %s217, 8
        %s219 = scalar_lea.vmem %s1, %s218
        %s220 = smul.u32 2, %s21
        %s221 = smul.u32 2, %s21
        %p222 = scmp.lt.s32.totalorder %s221, 1
        %s223 = scalar_select %p222, %s221, 1
        %s224 = scalar_lea.vmem %s2, %s223
        %s225 = smul.u32 2, %s21
        %s226 = smul.u32 32, %s22
        %s227 = smul.u32 2, %s21
        %v228 = vld [vmem:[%s213] sm:$0xff]
        %v229 = vld [vmem:[%s213 + $0x8] sm:$0xff]
        %v230 = vld [vmem:[%s213 + $0x10] sm:$0xff]
        %v231 = vld [vmem:[%s213 + $0x18] sm:$0xff]
        %v232 = vld [vmem:[%s213 + $0x20] sm:$0xff]
        %v233 = vld [vmem:[%s213 + $0x28] sm:$0xff]
        %v234 = vld [vmem:[%s213 + $0x30] sm:$0xff]
        %v235 = vld [vmem:[%s213 + $0x38] sm:$0xff]
        %v236 = vld [vmem:[%s213 + $0x40] sm:$0xff]
        %v237 = vld [vmem:[%s213 + $0x48] sm:$0xff]
        %v238 = vld [vmem:[%s213 + $0x50] sm:$0xff]
        %v239 = vld [vmem:[%s213 + $0x58] sm:$0xff]
        %v240 = vld [vmem:[%s213 + $0x60] sm:$0xff]
        %v241 = vld [vmem:[%s213 + $0x68] sm:$0xff]
        %v242 = vld [vmem:[%s213 + $0x70] sm:$0xff]
        %v243 = vld [vmem:[%s213 + $0x78] sm:$0xff]
        %v244 = vld [vmem:[%s213 + $0x80] sm:$0xff]
        %v245 = vld [vmem:[%s213 + $0x88] sm:$0xff]
        %v246 = vld [vmem:[%s213 + $0x90] sm:$0xff]
        %v247 = vld [vmem:[%s213 + $0x98] sm:$0xff]
        %v248 = vld [vmem:[%s213 + $0xa0] sm:$0xff]
        %v249 = vld [vmem:[%s213 + $0xa8] sm:$0xff]
        %v250 = vld [vmem:[%s213 + $0xb0] sm:$0xff]
        %v251 = vld [vmem:[%s213 + $0xb8] sm:$0xff]
        %v252 = vld [vmem:[%s213 + $0xc0] sm:$0xff]
        %v253 = vld [vmem:[%s213 + $0xc8] sm:$0xff]
        %v254 = vld [vmem:[%s213 + $0xd0] sm:$0xff]
        %v255 = vld [vmem:[%s213 + $0xd8] sm:$0xff]
        %v256 = vld [vmem:[%s213 + $0xe0] sm:$0xff]
        %v257 = vld [vmem:[%s213 + $0xe8] sm:$0xff]
        %v258 = vld [vmem:[%s213 + $0xf0] sm:$0xff]
        %v259 = vld [vmem:[%s213 + $0xf8] sm:$0xff]
        %v260 = vld [vmem:[%s219] sm:$0xff]
        %v261 = vld [vmem:[%s219 + $0x8] sm:$0xff]
        %v262 = vld [vmem:[%s219 + $0x10] sm:$0xff]
        %v263 = vld [vmem:[%s219 + $0x18] sm:$0xff]
        %v264 = vld [vmem:[%s219 + $0x20] sm:$0xff]
        %v265 = vld [vmem:[%s219 + $0x28] sm:$0xff]
        %v266 = vld [vmem:[%s219 + $0x30] sm:$0xff]
        %v267 = vld [vmem:[%s219 + $0x38] sm:$0xff]
        %v268 = vld [vmem:[%s219 + $0x40] sm:$0xff]
        %v269 = vld [vmem:[%s219 + $0x48] sm:$0xff]
        %v270 = vld [vmem:[%s219 + $0x50] sm:$0xff]
        %v271 = vld [vmem:[%s219 + $0x58] sm:$0xff]
        %v272 = vld [vmem:[%s219 + $0x60] sm:$0xff]
        %v273 = vld [vmem:[%s219 + $0x68] sm:$0xff]
        %v274 = vld [vmem:[%s219 + $0x70] sm:$0xff]
        %v275 = vld [vmem:[%s219 + $0x78] sm:$0xff]
        %v276 = vld [vmem:[%s224] sm:$0x3]
        %v278 = vlaneseq
        %v279 = vshrl.u32 %v278, 7
        %v280 = vsub.s32 0, %v279
        %v281 = vrot.slane %v276, %v280
        %v282 = vlaneseq
        %v283 = vshrl.u32 %v282, 7
        %v284 = vsub.s32 1, %v283
        %v285 = vrot.slane %v276, %v284
        %vm288 = vcmask 523264
        %v290 = vsel %vm288, %v228, 0
        %v293 = vsel %vm288, %v229, 0
        %v296 = vsel %vm288, %v230, 0
        %v299 = vsel %vm288, %v231, 0
        %v302 = vsel %vm288, %v232, 0
        %v305 = vsel %vm288, %v233, 0
        %v308 = vsel %vm288, %v234, 0
        %v311 = vsel %vm288, %v235, 0
        %v314 = vsel %vm288, %v236, 0
        %v317 = vsel %vm288, %v237, 0
        %v320 = vsel %vm288, %v238, 0
        %v323 = vsel %vm288, %v239, 0
        %v326 = vsel %vm288, %v240, 0
        %v329 = vsel %vm288, %v241, 0
        %v332 = vsel %vm288, %v242, 0
        %v335 = vsel %vm288, %v243, 0
        %v338 = vsel %vm288, %v244, 0
        %v341 = vsel %vm288, %v245, 0
        %v344 = vsel %vm288, %v246, 0
        %v347 = vsel %vm288, %v247, 0
        %v350 = vsel %vm288, %v248, 0
        %v353 = vsel %vm288, %v249, 0
        %v356 = vsel %vm288, %v250, 0
        %v359 = vsel %vm288, %v251, 0
        %v362 = vsel %vm288, %v252, 0
        %v365 = vsel %vm288, %v253, 0
        %v368 = vsel %vm288, %v254, 0
        %v371 = vsel %vm288, %v255, 0
        %v374 = vsel %vm288, %v256, 0
        %v377 = vsel %vm288, %v257, 0
        %v380 = vsel %vm288, %v258, 0
        %v383 = vsel %vm288, %v259, 0
        %385 = vmatprep.subr.mxu0 %v261
        %386 = vmatpush1.msra.mxu0 %v260
        %387 = vmatprep.subr.mxu0 %v263
        %388 = vmatpush1.msra.mxu0 %v262
        %389 = vmatprep.subr.mxu0 %v265
        %390 = vmatpush1.msra.mxu0 %v264
        %391 = vmatprep.subr.mxu0 %v267
        %392 = vmatpush1.msra.mxu0 %v266
        %393 = vmatprep.subr.mxu0 %v269
        %394 = vmatpush1.msra.mxu0 %v268
        %395 = vmatprep.subr.mxu0 %v271
        %396 = vmatpush1.msra.mxu0 %v270
        %397 = vmatprep.subr.mxu0 %v273
        %398 = vmatpush1.msra.mxu0 %v272
        %399 = vmatprep.subr.mxu0 %v275
        %400 = vmatpush1.msra.mxu0 %v274
        %401 = vmatprep.subr.mxu0 0.0
        %402 = vmatpush1.msra.mxu0 0.0
        %403 = vmatprep.subr.mxu0 0.0
        %404 = vmatpush1.msra.mxu0 0.0
        %405 = vmatprep.subr.mxu0 0.0
        %406 = vmatpush1.msra.mxu0 0.0
        %407 = vmatprep.subr.mxu0 0.0
        %408 = vmatpush1.msra.mxu0 0.0
        %409 = vmatprep.subr.mxu0 0.0
        %410 = vmatpush1.msra.mxu0 0.0
        %411 = vmatprep.subr.mxu0 0.0
        %412 = vmatpush1.msra.mxu0 0.0
        %413 = vmatprep.subr.mxu0 0.0
        %414 = vmatpush1.msra.mxu0 0.0
        %415 = vmatprep.subr.mxu0 0.0
        %416 = vmatpush1.msra.mxu0 0.0
        %417 = vmatprep.subr.mxu0 0.0
        %418 = vmatpush1.msra.mxu0 0.0
        %419 = vmatprep.subr.mxu0 0.0
        %420 = vmatpush1.msra.mxu0 0.0
        %421 = vmatprep.subr.mxu0 0.0
        %422 = vmatpush1.msra.mxu0 0.0
        %423 = vmatprep.subr.mxu0 0.0
        %424 = vmatpush1.msra.mxu0 0.0
        %425 = vmatprep.subr.mxu0 0.0
        %426 = vmatpush1.msra.mxu0 0.0
        %427 = vmatprep.subr.mxu0 0.0
        %428 = vmatpush1.msra.mxu0 0.0
        %429 = vmatprep.subr.mxu0 0.0
        %430 = vmatpush1.msra.mxu0 0.0
        %431 = vmatprep.subr.mxu0 0.0
        %432 = vmatpush1.msra.mxu0 0.0
        %433 = vmatprep.subr.mxu0 0.0
        %434 = vmatpush1.msra.mxu0 0.0
        %435 = vmatprep.subr.mxu0 0.0
        %436 = vmatpush1.msra.mxu0 0.0
        %437 = vmatprep.subr.mxu0 0.0
        %438 = vmatpush1.msra.mxu0 0.0
        %439 = vmatprep.subr.mxu0 0.0
        %440 = vmatpush1.msra.mxu0 0.0
        %441 = vmatprep.subr.mxu0 0.0
        %442 = vmatpush1.msra.mxu0 0.0
        %443 = vmatprep.subr.mxu0 0.0
        %444 = vmatpush1.msra.mxu0 0.0
        %445 = vmatprep.subr.mxu0 0.0
        %446 = vmatpush1.msra.mxu0 0.0
        %447 = vmatprep.subr.mxu0 0.0
        %448 = vmatpush1.msra.mxu0 0.0
        %449 = vmatprep.mubr.f32.mxu0 0.0
        %450 = vmatmul.mubr.f32.gmra.mrb[0].mxu0 %v290
        %v451 = vpop.f32.mrb[0].mxu0
        %v452 = vadd.f32 %v281, %v451
        %v453 = vpop.f32.mrb[0].mxu0
        %v454 = vadd.f32 %v285, %v453
        %455 = vmatprep.mubr.f32.mxu0 0.0
        %456 = vmatmul.mubr.f32.gmra.mrb[0].mxu0 %v293
        %v457 = vpop.f32.mrb[0].mxu0
        %v458 = vadd.f32 %v281, %v457
        %v459 = vpop.f32.mrb[0].mxu0
        %v460 = vadd.f32 %v285, %v459
        %461 = vmatprep.mubr.f32.mxu0 0.0
        %462 = vmatmul.mubr.f32.gmra.mrb[0].mxu0 %v296
        %v463 = vpop.f32.mrb[0].mxu0
        %v464 = vadd.f32 %v281, %v463
        %v465 = vpop.f32.mrb[0].mxu0
        %v466 = vadd.f32 %v285, %v465
        %467 = vmatprep.mubr.f32.mxu0 0.0
        %468 = vmatmul.mubr.f32.gmra.mrb[0].mxu0 %v299
        %v469 = vpop.f32.mrb[0].mxu0
        %v470 = vadd.f32 %v281, %v469
        %v471 = vpop.f32.mrb[0].mxu0
        %v472 = vadd.f32 %v285, %v471
        %473 = vmatprep.mubr.f32.mxu0 0.0
        %474 = vmatmul.mubr.f32.gmra.mrb[0].mxu0 %v302
        %v475 = vpop.f32.mrb[0].mxu0
        %v476 = vadd.f32 %v281, %v475
        %v477 = vpop.f32.mrb[0].mxu0
        %v478 = vadd.f32 %v285, %v477
        %479 = vmatprep.mubr.f32.mxu0 0.0
        %480 = vmatmul.mubr.f32.gmra.mrb[0].mxu0 %v305
        %v481 = vpop.f32.mrb[0].mxu0
        %v482 = vadd.f32 %v281, %v481
        %v483 = vpop.f32.mrb[0].mxu0
        %v484 = vadd.f32 %v285, %v483
        %485 = vmatprep.mubr.f32.mxu0 0.0
        %486 = vmatmul.mubr.f32.gmra.mrb[0].mxu0 %v308
        %v487 = vpop.f32.mrb[0].mxu0
        %v488 = vadd.f32 %v281, %v487
        %v489 = vpop.f32.mrb[0].mxu0
        %v490 = vadd.f32 %v285, %v489
        %491 = vmatprep.mubr.f32.mxu0 0.0
        %492 = vmatmul.mubr.f32.gmra.mrb[0].mxu0 %v311
        %v493 = vpop.f32.mrb[0].mxu0
        %v494 = vadd.f32 %v281, %v493
        %v495 = vpop.f32.mrb[0].mxu0
        %v496 = vadd.f32 %v285, %v495
        %497 = vmatprep.mubr.f32.mxu0 0.0
        %498 = vmatmul.mubr.f32.gmra.mrb[0].mxu0 %v314
        %v499 = vpop.f32.mrb[0].mxu0
        %v500 = vadd.f32 %v281, %v499
        %v501 = vpop.f32.mrb[0].mxu0
        %v502 = vadd.f32 %v285, %v501
        %503 = vmatprep.mubr.f32.mxu0 0.0
        %504 = vmatmul.mubr.f32.gmra.mrb[0].mxu0 %v317
        %v505 = vpop.f32.mrb[0].mxu0
        %v506 = vadd.f32 %v281, %v505
        %v507 = vpop.f32.mrb[0].mxu0
        %v508 = vadd.f32 %v285, %v507
        %509 = vmatprep.mubr.f32.mxu0 0.0
        %510 = vmatmul.mubr.f32.gmra.mrb[0].mxu0 %v320
        %v511 = vpop.f32.mrb[0].mxu0
        %v512 = vadd.f32 %v281, %v511
        %v513 = vpop.f32.mrb[0].mxu0
        %v514 = vadd.f32 %v285, %v513
        %515 = vmatprep.mubr.f32.mxu0 0.0
        %516 = vmatmul.mubr.f32.gmra.mrb[0].mxu0 %v323
        %v517 = vpop.f32.mrb[0].mxu0
        %v518 = vadd.f32 %v281, %v517
        %v519 = vpop.f32.mrb[0].mxu0
        %v520 = vadd.f32 %v285, %v519
        %521 = vmatprep.mubr.f32.mxu0 0.0
        %522 = vmatmul.mubr.f32.gmra.mrb[0].mxu0 %v326
        %v523 = vpop.f32.mrb[0].mxu0
        %v524 = vadd.f32 %v281, %v523
        %v525 = vpop.f32.mrb[0].mxu0
        %v526 = vadd.f32 %v285, %v525
        %527 = vmatprep.mubr.f32.mxu0 0.0
        %528 = vmatmul.mubr.f32.gmra.mrb[0].mxu0 %v329
        %v529 = vpop.f32.mrb[0].mxu0
        %v530 = vadd.f32 %v281, %v529
        %v531 = vpop.f32.mrb[0].mxu0
        %v532 = vadd.f32 %v285, %v531
        %533 = vmatprep.mubr.f32.mxu0 0.0
        %534 = vmatmul.mubr.f32.gmra.mrb[0].mxu0 %v332
        %v535 = vpop.f32.mrb[0].mxu0
        %v536 = vadd.f32 %v281, %v535
        %v537 = vpop.f32.mrb[0].mxu0
        %v538 = vadd.f32 %v285, %v537
        %539 = vmatprep.mubr.f32.mxu0 0.0
        %540 = vmatmul.mubr.f32.gmra.mrb[0].mxu0 %v335
        %v541 = vpop.f32.mrb[0].mxu0
        %v542 = vadd.f32 %v281, %v541
        %v543 = vpop.f32.mrb[0].mxu0
        %v544 = vadd.f32 %v285, %v543
        %545 = vmatprep.mubr.f32.mxu0 0.0
        %546 = vmatmul.mubr.f32.gmra.mrb[0].mxu0 %v338
        %v547 = vpop.f32.mrb[0].mxu0
        %v548 = vadd.f32 %v281, %v547
        %v549 = vpop.f32.mrb[0].mxu0
        %v550 = vadd.f32 %v285, %v549
        %551 = vmatprep.mubr.f32.mxu0 0.0
        %552 = vmatmul.mubr.f32.gmra.mrb[0].mxu0 %v341
        %v553 = vpop.f32.mrb[0].mxu0
        %v554 = vadd.f32 %v281, %v553
        %v555 = vpop.f32.mrb[0].mxu0
        %v556 = vadd.f32 %v285, %v555
        %557 = vmatprep.mubr.f32.mxu0 0.0
        %558 = vmatmul.mubr.f32.gmra.mrb[0].mxu0 %v344
        %v559 = vpop.f32.mrb[0].mxu0
        %v560 = vadd.f32 %v281, %v559
        %v561 = vpop.f32.mrb[0].mxu0
        %v562 = vadd.f32 %v285, %v561
        %563 = vmatprep.mubr.f32.mxu0 0.0
        %564 = vmatmul.mubr.f32.gmra.mrb[0].mxu0 %v347
        %v565 = vpop.f32.mrb[0].mxu0
        %v566 = vadd.f32 %v281, %v565
        %v567 = vpop.f32.mrb[0].mxu0
        %v568 = vadd.f32 %v285, %v567
        %569 = vmatprep.mubr.f32.mxu0 0.0
        %570 = vmatmul.mubr.f32.gmra.mrb[0].mxu0 %v350
        %v571 = vpop.f32.mrb[0].mxu0
        %v572 = vadd.f32 %v281, %v571
        %v573 = vpop.f32.mrb[0].mxu0
        %v574 = vadd.f32 %v285, %v573
        %575 = vmatprep.mubr.f32.mxu0 0.0
        %576 = vmatmul.mubr.f32.gmra.mrb[0].mxu0 %v353
        %v577 = vpop.f32.mrb[0].mxu0
        %v578 = vadd.f32 %v281, %v577
        %v579 = vpop.f32.mrb[0].mxu0
        %v580 = vadd.f32 %v285, %v579
        %581 = vmatprep.mubr.f32.mxu0 0.0
        %582 = vmatmul.mubr.f32.gmra.mrb[0].mxu0 %v356
        %v583 = vpop.f32.mrb[0].mxu0
        %v584 = vadd.f32 %v281, %v583
        %v585 = vpop.f32.mrb[0].mxu0
        %v586 = vadd.f32 %v285, %v585
        %587 = vmatprep.mubr.f32.mxu0 0.0
        %588 = vmatmul.mubr.f32.gmra.mrb[0].mxu0 %v359
        %v589 = vpop.f32.mrb[0].mxu0
        %v590 = vadd.f32 %v281, %v589
        %v591 = vpop.f32.mrb[0].mxu0
        %v592 = vadd.f32 %v285, %v591
        %593 = vmatprep.mubr.f32.mxu0 0.0
        %594 = vmatmul.mubr.f32.gmra.mrb[0].mxu0 %v362
        %v595 = vpop.f32.mrb[0].mxu0
        %v596 = vadd.f32 %v281, %v595
        %v597 = vpop.f32.mrb[0].mxu0
        %v598 = vadd.f32 %v285, %v597
        %599 = vmatprep.mubr.f32.mxu0 0.0
        %600 = vmatmul.mubr.f32.gmra.mrb[0].mxu0 %v365
        %v601 = vpop.f32.mrb[0].mxu0
        %v602 = vadd.f32 %v281, %v601
        %v603 = vpop.f32.mrb[0].mxu0
        %v604 = vadd.f32 %v285, %v603
        %605 = vmatprep.mubr.f32.mxu0 0.0
        %606 = vmatmul.mubr.f32.gmra.mrb[0].mxu0 %v368
        %v607 = vpop.f32.mrb[0].mxu0
        %v608 = vadd.f32 %v281, %v607
        %v609 = vpop.f32.mrb[0].mxu0
        %v610 = vadd.f32 %v285, %v609
        %611 = vmatprep.mubr.f32.mxu0 0.0
        %612 = vmatmul.mubr.f32.gmra.mrb[0].mxu0 %v371
        %v613 = vpop.f32.mrb[0].mxu0
        %v614 = vadd.f32 %v281, %v613
        %v615 = vpop.f32.mrb[0].mxu0
        %v616 = vadd.f32 %v285, %v615
        %617 = vmatprep.mubr.f32.mxu0 0.0
        %618 = vmatmul.mubr.f32.gmra.mrb[0].mxu0 %v374
        %v619 = vpop.f32.mrb[0].mxu0
        %v620 = vadd.f32 %v281, %v619
        %v621 = vpop.f32.mrb[0].mxu0
        %v622 = vadd.f32 %v285, %v621
        %623 = vmatprep.mubr.f32.mxu0 0.0
        %624 = vmatmul.mubr.f32.gmra.mrb[0].mxu0 %v377
        %v625 = vpop.f32.mrb[0].mxu0
        %v626 = vadd.f32 %v281, %v625
        %v627 = vpop.f32.mrb[0].mxu0
        %v628 = vadd.f32 %v285, %v627
        %629 = vmatprep.mubr.f32.mxu0 0.0
        %630 = vmatmul.mubr.f32.gmra.mrb[0].mxu0 %v380
        %v631 = vpop.f32.mrb[0].mxu0
        %v632 = vadd.f32 %v281, %v631
        %v633 = vpop.f32.mrb[0].mxu0
        %v634 = vadd.f32 %v285, %v633
        %635 = vmatprep.mubr.f32.mxu0 0.0
        %636 = vmatmul.mubr.f32.gmra.mrb[0].mxu0 %v383
        %v637 = vpop.f32.mrb[0].mxu0
        %v638 = vadd.f32 %v281, %v637
        %v639 = vpop.f32.mrb[0].mxu0
        %v640 = vadd.f32 %v285, %v639
        %641 = vdwg.mxu0
        %v642 = vmul.f32 %v452, 10.0
        %v643 = vmul.f32 %v454, 10.0
        %v644 = vmul.f32 %v458, 10.0
        %v645 = vmul.f32 %v460, 10.0
        %v646 = vmul.f32 %v464, 10.0
        %v647 = vmul.f32 %v466, 10.0
        %v648 = vmul.f32 %v470, 10.0
        %v649 = vmul.f32 %v472, 10.0
        %v650 = vmul.f32 %v476, 10.0
        %v651 = vmul.f32 %v478, 10.0
        %v652 = vmul.f32 %v482, 10.0
        %v653 = vmul.f32 %v484, 10.0
        %v654 = vmul.f32 %v488, 10.0
        %v655 = vmul.f32 %v490, 10.0
        %v656 = vmul.f32 %v494, 10.0
        %v657 = vmul.f32 %v496, 10.0
        %v658 = vmul.f32 %v500, 10.0
        %v659 = vmul.f32 %v502, 10.0
        %v660 = vmul.f32 %v506, 10.0
        %v661 = vmul.f32 %v508, 10.0
        %v662 = vmul.f32 %v512, 10.0
        %v663 = vmul.f32 %v514, 10.0
        %v664 = vmul.f32 %v518, 10.0
        %v665 = vmul.f32 %v520, 10.0
        %v666 = vmul.f32 %v524, 10.0
        %v667 = vmul.f32 %v526, 10.0
        %v668 = vmul.f32 %v530, 10.0
        %v669 = vmul.f32 %v532, 10.0
        %v670 = vmul.f32 %v536, 10.0
        %v671 = vmul.f32 %v538, 10.0
        %v672 = vmul.f32 %v542, 10.0
        %v673 = vmul.f32 %v544, 10.0
        %v674 = vmul.f32 %v548, 10.0
        %v675 = vmul.f32 %v550, 10.0
        %v676 = vmul.f32 %v554, 10.0
        %v677 = vmul.f32 %v556, 10.0
        %v678 = vmul.f32 %v560, 10.0
        %v679 = vmul.f32 %v562, 10.0
        %v680 = vmul.f32 %v566, 10.0
        %v681 = vmul.f32 %v568, 10.0
        %v682 = vmul.f32 %v572, 10.0
        %v683 = vmul.f32 %v574, 10.0
        %v684 = vmul.f32 %v578, 10.0
        %v685 = vmul.f32 %v580, 10.0
        %v686 = vmul.f32 %v584, 10.0
        %v687 = vmul.f32 %v586, 10.0
        %v688 = vmul.f32 %v590, 10.0
        %v689 = vmul.f32 %v592, 10.0
        %v690 = vmul.f32 %v596, 10.0
        %v691 = vmul.f32 %v598, 10.0
        %v692 = vmul.f32 %v602, 10.0
        %v693 = vmul.f32 %v604, 10.0
        %v694 = vmul.f32 %v608, 10.0
        %v695 = vmul.f32 %v610, 10.0
        %v696 = vmul.f32 %v614, 10.0
        %v697 = vmul.f32 %v616, 10.0
        %v698 = vmul.f32 %v620, 10.0
        %v699 = vmul.f32 %v622, 10.0
        %v700 = vmul.f32 %v626, 10.0
        %v701 = vmul.f32 %v628, 10.0
        %v702 = vmul.f32 %v632, 10.0
        %v703 = vmul.f32 %v634, 10.0
        %v704 = vmul.f32 %v638, 10.0
        %v705 = vmul.f32 %v640, 10.0
        %v706 = vmul.f32 %v642, %v642
        %v707 = vmul.f32 %v643, %v643
        %v708 = vmul.f32 %v644, %v644
        %v709 = vmul.f32 %v645, %v645
        %v710 = vmul.f32 %v646, %v646
        %v711 = vmul.f32 %v647, %v647
        %v712 = vmul.f32 %v648, %v648
        %v713 = vmul.f32 %v649, %v649
        %v714 = vmul.f32 %v650, %v650
        %v715 = vmul.f32 %v651, %v651
        %v716 = vmul.f32 %v652, %v652
        %v717 = vmul.f32 %v653, %v653
        %v718 = vmul.f32 %v654, %v654
        %v719 = vmul.f32 %v655, %v655
        %v720 = vmul.f32 %v656, %v656
        %v721 = vmul.f32 %v657, %v657
        %v722 = vmul.f32 %v658, %v658
        %v723 = vmul.f32 %v659, %v659
        %v724 = vmul.f32 %v660, %v660
        %v725 = vmul.f32 %v661, %v661
        %v726 = vmul.f32 %v662, %v662
        %v727 = vmul.f32 %v663, %v663
        %v728 = vmul.f32 %v664, %v664
        %v729 = vmul.f32 %v665, %v665
        %v730 = vmul.f32 %v666, %v666
        %v731 = vmul.f32 %v667, %v667
        %v732 = vmul.f32 %v668, %v668
        %v733 = vmul.f32 %v669, %v669
        %v734 = vmul.f32 %v670, %v670
        %v735 = vmul.f32 %v671, %v671
        %v736 = vmul.f32 %v672, %v672
        %v737 = vmul.f32 %v673, %v673
        %v738 = vmul.f32 %v674, %v674
        %v739 = vmul.f32 %v675, %v675
        %v740 = vmul.f32 %v676, %v676
        %v741 = vmul.f32 %v677, %v677
        %v742 = vmul.f32 %v678, %v678
        %v743 = vmul.f32 %v679, %v679
        %v744 = vmul.f32 %v680, %v680
        %v745 = vmul.f32 %v681, %v681
        %v746 = vmul.f32 %v682, %v682
        %v747 = vmul.f32 %v683, %v683
        %v748 = vmul.f32 %v684, %v684
        %v749 = vmul.f32 %v685, %v685
        %v750 = vmul.f32 %v686, %v686
        %v751 = vmul.f32 %v687, %v687
        %v752 = vmul.f32 %v688, %v688
        %v753 = vmul.f32 %v689, %v689
        %v754 = vmul.f32 %v690, %v690
        %v755 = vmul.f32 %v691, %v691
        %v756 = vmul.f32 %v692, %v692
        %v757 = vmul.f32 %v693, %v693
        %v758 = vmul.f32 %v694, %v694
        %v759 = vmul.f32 %v695, %v695
        %v760 = vmul.f32 %v696, %v696
        %v761 = vmul.f32 %v697, %v697
        %v762 = vmul.f32 %v698, %v698
        %v763 = vmul.f32 %v699, %v699
        %v764 = vmul.f32 %v700, %v700
        %v765 = vmul.f32 %v701, %v701
        %v766 = vmul.f32 %v702, %v702
        %v767 = vmul.f32 %v703, %v703
        %v768 = vmul.f32 %v704, %v704
        %v769 = vmul.f32 %v705, %v705
        %v770 = vsub.f32 0.0, %v706
        %v771 = vsub.f32 0.0, %v707
        %v772 = vsub.f32 0.0, %v708
        %v773 = vsub.f32 0.0, %v709
        %v774 = vsub.f32 0.0, %v710
        %v775 = vsub.f32 0.0, %v711
        %v776 = vsub.f32 0.0, %v712
        %v777 = vsub.f32 0.0, %v713
        %v778 = vsub.f32 0.0, %v714
        %v779 = vsub.f32 0.0, %v715
        %v780 = vsub.f32 0.0, %v716
        %v781 = vsub.f32 0.0, %v717
        %v782 = vsub.f32 0.0, %v718
        %v783 = vsub.f32 0.0, %v719
        %v784 = vsub.f32 0.0, %v720
        %v785 = vsub.f32 0.0, %v721
        %v786 = vsub.f32 0.0, %v722
        %v787 = vsub.f32 0.0, %v723
        %v788 = vsub.f32 0.0, %v724
        %v789 = vsub.f32 0.0, %v725
        %v790 = vsub.f32 0.0, %v726
        %v791 = vsub.f32 0.0, %v727
        %v792 = vsub.f32 0.0, %v728
        %v793 = vsub.f32 0.0, %v729
        %v794 = vsub.f32 0.0, %v730
        %v795 = vsub.f32 0.0, %v731
        %v796 = vsub.f32 0.0, %v732
        %v797 = vsub.f32 0.0, %v733
        %v798 = vsub.f32 0.0, %v734
        %v799 = vsub.f32 0.0, %v735
        %v800 = vsub.f32 0.0, %v736
        %v801 = vsub.f32 0.0, %v737
        %v802 = vsub.f32 0.0, %v738
        %v803 = vsub.f32 0.0, %v739
        %v804 = vsub.f32 0.0, %v740
        %v805 = vsub.f32 0.0, %v741
        %v806 = vsub.f32 0.0, %v742
        %v807 = vsub.f32 0.0, %v743
        %v808 = vsub.f32 0.0, %v744
        %v809 = vsub.f32 0.0, %v745
        %v810 = vsub.f32 0.0, %v746
        %v811 = vsub.f32 0.0, %v747
        %v812 = vsub.f32 0.0, %v748
        %v813 = vsub.f32 0.0, %v749
        %v814 = vsub.f32 0.0, %v750
        %v815 = vsub.f32 0.0, %v751
        %v816 = vsub.f32 0.0, %v752
        %v817 = vsub.f32 0.0, %v753
        %v818 = vsub.f32 0.0, %v754
        %v819 = vsub.f32 0.0, %v755
        %v820 = vsub.f32 0.0, %v756
        %v821 = vsub.f32 0.0, %v757
        %v822 = vsub.f32 0.0, %v758
        %v823 = vsub.f32 0.0, %v759
        %v824 = vsub.f32 0.0, %v760
        %v825 = vsub.f32 0.0, %v761
        %v826 = vsub.f32 0.0, %v762
        %v827 = vsub.f32 0.0, %v763
        %v828 = vsub.f32 0.0, %v764
        %v829 = vsub.f32 0.0, %v765
        %v830 = vsub.f32 0.0, %v766
        %v831 = vsub.f32 0.0, %v767
        %v832 = vsub.f32 0.0, %v768
        %v833 = vsub.f32 0.0, %v769
        %v834 = vmul.f32 %v770, 1.442695
        %v835 = vpow.pop %v834
        %v836 = vmul.f32 %v771, 1.442695
        %v837 = vpow.pop %v836
        %v838 = vmul.f32 %v772, 1.442695
        %v839 = vpow.pop %v838
        %v840 = vmul.f32 %v773, 1.442695
        %v841 = vpow.pop %v840
        %v842 = vmul.f32 %v774, 1.442695
        %v843 = vpow.pop %v842
        %v844 = vmul.f32 %v775, 1.442695
        %v845 = vpow.pop %v844
        %v846 = vmul.f32 %v776, 1.442695
        %v847 = vpow.pop %v846
        %v848 = vmul.f32 %v777, 1.442695
        %v849 = vpow.pop %v848
        %v850 = vmul.f32 %v778, 1.442695
        %v851 = vpow.pop %v850
        %v852 = vmul.f32 %v779, 1.442695
        %v853 = vpow.pop %v852
        %v854 = vmul.f32 %v780, 1.442695
        %v855 = vpow.pop %v854
        %v856 = vmul.f32 %v781, 1.442695
        %v857 = vpow.pop %v856
        %v858 = vmul.f32 %v782, 1.442695
        %v859 = vpow.pop %v858
        %v860 = vmul.f32 %v783, 1.442695
        %v861 = vpow.pop %v860
        %v862 = vmul.f32 %v784, 1.442695
        %v863 = vpow.pop %v862
        %v864 = vmul.f32 %v785, 1.442695
        %v865 = vpow.pop %v864
        %v866 = vmul.f32 %v786, 1.442695
        %v867 = vpow.pop %v866
        %v868 = vmul.f32 %v787, 1.442695
        %v869 = vpow.pop %v868
        %v870 = vmul.f32 %v788, 1.442695
        %v871 = vpow.pop %v870
        %v872 = vmul.f32 %v789, 1.442695
        %v873 = vpow.pop %v872
        %v874 = vmul.f32 %v790, 1.442695
        %v875 = vpow.pop %v874
        %v876 = vmul.f32 %v791, 1.442695
        %v877 = vpow.pop %v876
        %v878 = vmul.f32 %v792, 1.442695
        %v879 = vpow.pop %v878
        %v880 = vmul.f32 %v793, 1.442695
        %v881 = vpow.pop %v880
        %v882 = vmul.f32 %v794, 1.442695
        %v883 = vpow.pop %v882
        %v884 = vmul.f32 %v795, 1.442695
        %v885 = vpow.pop %v884
        %v886 = vmul.f32 %v796, 1.442695
        %v887 = vpow.pop %v886
        %v888 = vmul.f32 %v797, 1.442695
        %v889 = vpow.pop %v888
        %v890 = vmul.f32 %v798, 1.442695
        %v891 = vpow.pop %v890
        %v892 = vmul.f32 %v799, 1.442695
        %v893 = vpow.pop %v892
        %v894 = vmul.f32 %v800, 1.442695
        %v895 = vpow.pop %v894
        %v896 = vmul.f32 %v801, 1.442695
        %v897 = vpow.pop %v896
        %v898 = vmul.f32 %v802, 1.442695
        %v899 = vpow.pop %v898
        %v900 = vmul.f32 %v803, 1.442695
        %v901 = vpow.pop %v900
        %v902 = vmul.f32 %v804, 1.442695
        %v903 = vpow.pop %v902
        %v904 = vmul.f32 %v805, 1.442695
        %v905 = vpow.pop %v904
        %v906 = vmul.f32 %v806, 1.442695
        %v907 = vpow.pop %v906
        %v908 = vmul.f32 %v807, 1.442695
        %v909 = vpow.pop %v908
        %v910 = vmul.f32 %v808, 1.442695
        %v911 = vpow.pop %v910
        %v912 = vmul.f32 %v809, 1.442695
        %v913 = vpow.pop %v912
        %v914 = vmul.f32 %v810, 1.442695
        %v915 = vpow.pop %v914
        %v916 = vmul.f32 %v811, 1.442695
        %v917 = vpow.pop %v916
        %v918 = vmul.f32 %v812, 1.442695
        %v919 = vpow.pop %v918
        %v920 = vmul.f32 %v813, 1.442695
        %v921 = vpow.pop %v920
        %v922 = vmul.f32 %v814, 1.442695
        %v923 = vpow.pop %v922
        %v924 = vmul.f32 %v815, 1.442695
        %v925 = vpow.pop %v924
        %v926 = vmul.f32 %v816, 1.442695
        %v927 = vpow.pop %v926
        %v928 = vmul.f32 %v817, 1.442695
        %v929 = vpow.pop %v928
        %v930 = vmul.f32 %v818, 1.442695
        %v931 = vpow.pop %v930
        %v932 = vmul.f32 %v819, 1.442695
        %v933 = vpow.pop %v932
        %v934 = vmul.f32 %v820, 1.442695
        %v935 = vpow.pop %v934
        %v936 = vmul.f32 %v821, 1.442695
        %v937 = vpow.pop %v936
        %v938 = vmul.f32 %v822, 1.442695
        %v939 = vpow.pop %v938
        %v940 = vmul.f32 %v823, 1.442695
        %v941 = vpow.pop %v940
        %v942 = vmul.f32 %v824, 1.442695
        %v943 = vpow.pop %v942
        %v944 = vmul.f32 %v825, 1.442695
        %v945 = vpow.pop %v944
        %v946 = vmul.f32 %v826, 1.442695
        %v947 = vpow.pop %v946
        %v948 = vmul.f32 %v827, 1.442695
        %v949 = vpow.pop %v948
        %v950 = vmul.f32 %v828, 1.442695
        %v951 = vpow.pop %v950
        %v952 = vmul.f32 %v829, 1.442695
        %v953 = vpow.pop %v952
        %v954 = vmul.f32 %v830, 1.442695
        %v955 = vpow.pop %v954
        %v956 = vmul.f32 %v831, 1.442695
        %v957 = vpow.pop %v956
        %v958 = vmul.f32 %v832, 1.442695
        %v959 = vpow.pop %v958
        %v960 = vmul.f32 %v833, 1.442695
        %v961 = vpow.pop %v960
        %962 = vst [vmem:[%s208] sm:$0xff] %v835
        %963 = vst [vmem:[%s208 + $0x8] sm:$0xff] %v837
        %964 = vst [vmem:[%s208 + $0x10] sm:$0xff] %v839
        %965 = vst [vmem:[%s208 + $0x18] sm:$0xff] %v841
        %966 = vst [vmem:[%s208 + $0x20] sm:$0xff] %v843
        %967 = vst [vmem:[%s208 + $0x28] sm:$0xff] %v845
        %968 = vst [vmem:[%s208 + $0x30] sm:$0xff] %v847
        %969 = vst [vmem:[%s208 + $0x38] sm:$0xff] %v849
        %970 = vst [vmem:[%s208 + $0x40] sm:$0xff] %v851
        %971 = vst [vmem:[%s208 + $0x48] sm:$0xff] %v853
        %972 = vst [vmem:[%s208 + $0x50] sm:$0xff] %v855
        %973 = vst [vmem:[%s208 + $0x58] sm:$0xff] %v857
        %974 = vst [vmem:[%s208 + $0x60] sm:$0xff] %v859
        %975 = vst [vmem:[%s208 + $0x68] sm:$0xff] %v861
        %976 = vst [vmem:[%s208 + $0x70] sm:$0xff] %v863
        %977 = vst [vmem:[%s208 + $0x78] sm:$0xff] %v865
        %978 = vst [vmem:[%s208 + $0x80] sm:$0xff] %v867
        %979 = vst [vmem:[%s208 + $0x88] sm:$0xff] %v869
        %980 = vst [vmem:[%s208 + $0x90] sm:$0xff] %v871
        %981 = vst [vmem:[%s208 + $0x98] sm:$0xff] %v873
        %982 = vst [vmem:[%s208 + $0xa0] sm:$0xff] %v875
        %983 = vst [vmem:[%s208 + $0xa8] sm:$0xff] %v877
        %984 = vst [vmem:[%s208 + $0xb0] sm:$0xff] %v879
        %985 = vst [vmem:[%s208 + $0xb8] sm:$0xff] %v881
        %986 = vst [vmem:[%s208 + $0xc0] sm:$0xff] %v883
        %987 = vst [vmem:[%s208 + $0xc8] sm:$0xff] %v885
        %988 = vst [vmem:[%s208 + $0xd0] sm:$0xff] %v887
        %989 = vst [vmem:[%s208 + $0xd8] sm:$0xff] %v889
        %990 = vst [vmem:[%s208 + $0xe0] sm:$0xff] %v891
        %991 = vst [vmem:[%s208 + $0xe8] sm:$0xff] %v893
        %992 = vst [vmem:[%s208 + $0xf0] sm:$0xff] %v895
        %993 = vst [vmem:[%s208 + $0xf8] sm:$0xff] %v897
        %994 = vst [vmem:[%s208 + $0x100] sm:$0xff] %v899
        %995 = vst [vmem:[%s208 + $0x108] sm:$0xff] %v901
        %996 = vst [vmem:[%s208 + $0x110] sm:$0xff] %v903
        %997 = vst [vmem:[%s208 + $0x118] sm:$0xff] %v905
        %998 = vst [vmem:[%s208 + $0x120] sm:$0xff] %v907
        %999 = vst [vmem:[%s208 + $0x128] sm:$0xff] %v909
        %1000 = vst [vmem:[%s208 + $0x130] sm:$0xff] %v911
        %1001 = vst [vmem:[%s208 + $0x138] sm:$0xff] %v913
        %1002 = vst [vmem:[%s208 + $0x140] sm:$0xff] %v915
        %1003 = vst [vmem:[%s208 + $0x148] sm:$0xff] %v917
        %1004 = vst [vmem:[%s208 + $0x150] sm:$0xff] %v919
        %1005 = vst [vmem:[%s208 + $0x158] sm:$0xff] %v921
        %1006 = vst [vmem:[%s208 + $0x160] sm:$0xff] %v923
        %1007 = vst [vmem:[%s208 + $0x168] sm:$0xff] %v925
        %1008 = vst [vmem:[%s208 + $0x170] sm:$0xff] %v927
        %1009 = vst [vmem:[%s208 + $0x178] sm:$0xff] %v929
        %1010 = vst [vmem:[%s208 + $0x180] sm:$0xff] %v931
        %1011 = vst [vmem:[%s208 + $0x188] sm:$0xff] %v933
        %1012 = vst [vmem:[%s208 + $0x190] sm:$0xff] %v935
        %1013 = vst [vmem:[%s208 + $0x198] sm:$0xff] %v937
        %1014 = vst [vmem:[%s208 + $0x1a0] sm:$0xff] %v939
        %1015 = vst [vmem:[%s208 + $0x1a8] sm:$0xff] %v941
        %1016 = vst [vmem:[%s208 + $0x1b0] sm:$0xff] %v943
        %1017 = vst [vmem:[%s208 + $0x1b8] sm:$0xff] %v945
        %1018 = vst [vmem:[%s208 + $0x1c0] sm:$0xff] %v947
        %1019 = vst [vmem:[%s208 + $0x1c8] sm:$0xff] %v949
        %1020 = vst [vmem:[%s208 + $0x1d0] sm:$0xff] %v951
        %1021 = vst [vmem:[%s208 + $0x1d8] sm:$0xff] %v953
        %1022 = vst [vmem:[%s208 + $0x1e0] sm:$0xff] %v955
        %1023 = vst [vmem:[%s208 + $0x1e8] sm:$0xff] %v957
        %1024 = vst [vmem:[%s208 + $0x1f0] sm:$0xff] %v959
        %1025 = vst [vmem:[%s208 + $0x1f8] sm:$0xff] %v961
        %s1026 = sand.u32 %s117, 1
        %s1027 = scalar_lea.sflag [#allocation3], %s1026
        %s1028 = sand.u32 %s117, 1
        %s1029 = smul.addr %s1028, 512
        %s1030 = scalar_lea.vmem [#allocation2], %s1029
        // Predicated region
        $region33: #{tpu_custom_call.1} parent=31 // pred_check
          %p1031 = pneg %p127
        $region34: #{tpu_custom_call.1} parent=31 // pred_check_branch
          %1033 = sbr.rel (%p1031) target = $region36
        $region35: #{tpu_custom_call.1} parent=31 // pred_region
          %s1034 = smul.u32 32, %s22
          %s1035 = smul.u32 2, %s21
          %s1037 = ssub.s32 8192, 8192
          %1038 = vsyncadd %s1027, %s1037
          %s1039 = smul.addr %s1034, 2
          %s1040 = sadd.s32 %s1035, %s1039
          %s1041 = smul.addr %s1040, 128
          %s1042 = scalar_lea.hbm %s3, %s1041
          %s1043 = sshll.u32 %s1030, 4
          %s1044 = int_to_ptr.vmem [resolvable:$true] %s1043
          %1049 = dma.vmem_to_hbm [thread:$0]  %s1044, 8192, %s1042, %s1027, 256, 256, 16
        $region36: #{tpu_custom_call.1} parent=31 // pred_fallthru
          _
      $region32: #{tpu_custom_call.1} parent=5 // pred_fallthru
        _
      %p1050 = scmp.le.s32.totalorder 2, %s12
      // Predicated region
      $region37: #{tpu_custom_call.1} parent=5 // pred_check
        %p1051 = pneg %p1050
      $region38: #{tpu_custom_call.1} parent=5 // pred_check_branch
        %1053 = sbr.rel (%p1051) target = $region40
      $region39: #{tpu_custom_call.1} parent=5 // pred_region
        %s1054 = ssub.s32 %s12, 2
        // Predicated region
        $region41: #{tpu_custom_call.1} parent=39 // pred_check
          %p1055 = pneg %p133
        $region42: #{tpu_custom_call.1} parent=39 // pred_check_branch
          %1057 = sbr.rel (%p1055) target = $region44
        $region43: #{tpu_custom_call.1} parent=39 // pred_region
          %s1058 = sand.u32 %s118, 1
          %s1059 = scalar_lea.sflag [#allocation3], %s1058
          %s1060 = sand.u32 %s118, 1
          %s1061 = smul.addr %s1060, 512
          %s1062 = scalar_lea.vmem [#allocation2], %s1061
          %1063 = dma.done %s1059, 8192
        $region44: #{tpu_custom_call.1} parent=39 // pred_fallthru
          _
      $region40: #{tpu_custom_call.1} parent=5 // pred_fallthru
        _
    $region6: #{tpu_custom_call.1} parent=1 // loop_footer
      %s16 = sadd.s32 1, %s12
    $region7: #{tpu_custom_call.1} parent=1 // loop_footer_branch
      %11 = sbr.rel target = $region3
    $region8: #{tpu_custom_call.1} parent=1 // loop_exit
      _
    %1064 = vsyncpa [#allocation3], 1
    %s1065 = scalar_lea.sflag [#allocation3], 1
    %1066 = vsyncpa %s1065, 1

</llo_original>
